<compile_context>
chip_gen: v6e
topology: v6e:2x2x1
jax: 0.10.0
libtpu: 0.0.40
codegen_flags: <defaults>
</compile_context>

<pallas_src>
import functools

import jax
import jax.numpy as jnp
from jax import lax
from jax.experimental import pallas as pl
from jax.experimental.pallas import tpu as pltpu

BN_EPS = 1e-5
_LANE = 128
_MAX_X_BLOCK_BYTES = 8 << 20     # one pipeline buffer of the x block (2x double-buffered)
_MAX_OUT_BLOCK_BYTES = 8 << 20   # one pipeline buffer of the output fill block
_VMEM_LIMIT_BYTES = 48 << 20     # < v7x physical 64 MiB; well under v5e/v6e 128 MiB


def _round_up(v, m):
    return (v + m - 1) // m * m


def _pick_chunk(s_padded, rows, itemsize, max_block_bytes):
    """Largest multiple-of-128 lane chunk dividing `s_padded` such that one
    (rows, chunk) pipeline buffer stays under `max_block_bytes`.

    `s_padded` must already be a multiple of 128, so the search always
    terminates at a lane-dense divisor (worst case 128 lanes)."""
    per_lane = max(rows * itemsize, 1)
    max_lanes = max(_LANE, (max_block_bytes // per_lane) // _LANE * _LANE)
    chunk = min(s_padded, max_lanes)
    while s_padded % chunk != 0:
        chunk -= _LANE
    return chunk


def _pick_lanes(chunk):
    """Accumulator width: start at 128 lanes, widen up to 512 while it divides chunk."""
    lanes = _LANE
    while lanes < 512 and chunk % (2 * lanes) == 0:
        lanes *= 2
    return lanes


def pool_conv_bn_relu_kernel(x_ref, w_ref, b_ref, y_ref, acc_ref, *, lanes):
    # x_ref:   (C_in, chunk)  lane-dense spatial slice of one batch element
    # w_ref:   (C_out, C_in)  conv weight with BN scale and 1/(H*W) folded in
    # b_ref:   (C_out, 1)     folded BN bias
    # y_ref:   (C_out, 1)     pooled -> conv -> BN -> ReLU result for this n
    # acc_ref: (C_in, lanes)  f32 running partial sums (pure VPU adds per chunk)
    k = pl.program_id(1)

    @pl.when(k == 0)
    def _():
        acc_ref[...] = jnp.zeros_like(acc_ref)

    chunk = x_ref.shape[-1]
    num_sub = chunk // lanes

    def _accum(i, carry):
        off = pl.multiple_of(i * lanes, lanes)
        acc_ref[...] += x_ref[:, pl.ds(off, lanes)].astype(jnp.float32)
        return carry

    lax.fori_loop(0, num_sub, _accum, 0, unroll=(num_sub <= 16))

    @pl.when(k == pl.num_programs(1) - 1)
    def _():
        # One small MXU matmul over the still-wide accumulator, then a single
        # cross-lane reduce of the tiny (C_out, lanes) product.
        w = w_ref[...].astype(jnp.float32)
        prod = jnp.dot(w, acc_ref[...], preferred_element_type=jnp.float32)
        y = jnp.sum(prod, axis=-1, keepdims=True) + b_ref[...].astype(jnp.float32)
        y_ref[...] = jnp.maximum(y, 0.0).astype(y_ref.dtype)


def broadcast_fill_kernel(y_ref, o_ref):
    # y_ref: (N, C_out, 1); o_ref: (N, C_out, tile) -- pure lane broadcast.
    # Bilinear upsample of a 1x1 source (any align_corners) is exactly this.
    o_ref[...] = jnp.broadcast_to(y_ref[...], o_ref.shape).astype(o_ref.dtype)


def aspp_pooling(x, weight, gamma, beta, running_mean, running_var):
    """x: (N, C_in, H, W). weight: (C_out, C_in[,1,1]). Returns (N, C_out, H, W)."""
    n, c_in, h, w_sp = x.shape
    c_out = weight.shape[0]
    s = h * w_sp
    s_padded = _round_up(s, _LANE)

    # Fold inference-mode BatchNorm and the 1/(H*W) mean scale into the 1x1
    # conv weight; fold the BN shift into a bias:
    #   y = ReLU( (W * g*rsqrt(var+eps) / (H*W)) @ sum_hw(x) + (beta - mean*g*rsqrt(var+eps)) )
    inv_std = lax.rsqrt(running_var.astype(jnp.float32) + BN_EPS)
    scale = gamma.astype(jnp.float32) * inv_std                          # (C_out,)
    w_folded = (weight.reshape(c_out, c_in).astype(jnp.float32)
                * scale[:, None]) * (1.0 / float(s))
    b_folded = (beta.astype(jnp.float32)
                - running_mean.astype(jnp.float32) * scale).reshape(c_out, 1)

    # Lane-dense layout: flatten spatial dims onto the lane axis and zero-pad
    # to a multiple of 128 (zeros don't perturb the sum; 1/(H*W) keeps the
    # mean exact).  Input stays in its source dtype through the DMA.
    x_flat = x.reshape(n, c_in, s)
    if s_padded != s:
        x_flat = jnp.pad(x_flat, ((0, 0), (0, 0), (0, s_padded - s)))

    # ---- Kernel 1: tiled global-avg-pool + 1x1 conv + BN + ReLU ------------
    chunk = _pick_chunk(s_padded, rows=c_in, itemsize=x.dtype.itemsize,
                        max_block_bytes=_MAX_X_BLOCK_BYTES)
    lanes = _pick_lanes(chunk)

    y_small = pl.pallas_call(
        functools.partial(pool_conv_bn_relu_kernel, lanes=lanes),
        out_shape=jax.ShapeDtypeStruct((n, c_out, 1), jnp.float32),
        grid_spec=pltpu.PrefetchScalarGridSpec(
            num_scalar_prefetch=0,
            grid=(n, s_padded // chunk),
            in_specs=[
                pl.BlockSpec((None, c_in, chunk), lambda b, k: (b, 0, k)),
                pl.BlockSpec((c_out, c_in), lambda b, k: (0, 0)),
                pl.BlockSpec((c_out, 1), lambda b, k: (0, 0)),
            ],
            out_specs=pl.BlockSpec((None, c_out, 1), lambda b, k: (b, 0, 0)),
            scratch_shapes=[pltpu.VMEM((c_in, lanes), jnp.float32)],
        ),
        compiler_params=pltpu.CompilerParams(
            dimension_semantics=("parallel", "arbitrary"),
            vmem_limit_bytes=_VMEM_LIMIT_BYTES),
    )(x_flat, w_folded, b_folded)

    # ---- Kernel 2: lane-dense broadcast/fill back to (N, C_out, H*W) -------
    tile = _pick_chunk(s_padded, rows=n * c_out, itemsize=x.dtype.itemsize,
                       max_block_bytes=_MAX_OUT_BLOCK_BYTES)
    out_flat = pl.pallas_call(
        broadcast_fill_kernel,
        out_shape=jax.ShapeDtypeStruct((n, c_out, s_padded), x.dtype),
        grid_spec=pltpu.PrefetchScalarGridSpec(
            num_scalar_prefetch=0,
            grid=(s_padded // tile,),
            in_specs=[pl.BlockSpec((n, c_out, 1), lambda t: (0, 0, 0))],
            out_specs=pl.BlockSpec((n, c_out, tile), lambda t: (0, 0, t)),
        ),
        compiler_params=pltpu.CompilerParams(
            dimension_semantics=("parallel",),
            vmem_limit_bytes=_VMEM_LIMIT_BYTES),
    )(y_small)

    if s_padded != s:
        out_flat = out_flat[:, :, :s]
    return out_flat.reshape(n, c_out, h, w_sp)


def aspp_pooling_ref(x, weight, gamma, beta, running_mean, running_var):
    """Pure-JAX reference of the PyTorch forward (inference-mode BN)."""
    c_out = weight.shape[0]
    w2 = weight.reshape(c_out, -1)
    pooled = jnp.mean(x, axis=(2, 3))                                # (N, C_in)
    y = pooled @ w2.T                                                # (N, C_out)
    y = (y - running_mean) / jnp.sqrt(running_var + BN_EPS) * gamma + beta
    y = jnp.maximum(y, 0.0)
    n = y.shape[0]
    h, w = x.shape[-2:]
    return jnp.broadcast_to(y.reshape(n, c_out, 1, 1), (n, c_out, h, w))


if __name__ == "__main__":
    key = jax.random.PRNGKey(0)
    k_x, k_w, k_g, k_b, k_m, k_v = jax.random.split(key, 6)

    N, C_IN, C_OUT, H, W = 2, 4, 8, 16, 16

    x = jax.random.normal(k_x, (N, C_IN, H, W), dtype=jnp.float32)
    # Conv2d(C_IN, C_OUT, 1, bias=False) weight: (C_OUT, C_IN, 1, 1) -> (C_OUT, C_IN)
    weight = jax.random.normal(k_w, (C_OUT, C_IN), dtype=jnp.float32) * 0.1
    gamma = 1.0 + 0.1 * jax.random.normal(k_g, (C_OUT,), dtype=jnp.float32)
    beta = 0.1 * jax.random.normal(k_b, (C_OUT,), dtype=jnp.float32)
    running_mean = 0.1 * jax.random.normal(k_m, (C_OUT,), dtype=jnp.float32)
    running_var = jnp.abs(
        1.0 + 0.1 * jax.random.normal(k_v, (C_OUT,), dtype=jnp.float32))

    out = aspp_pooling(x, weight, gamma, beta, running_mean, running_var)
    out = jax.block_until_ready(out)

    ref = aspp_pooling_ref(x, weight, gamma, beta, running_mean, running_var)
    assert out.shape == (N, C_OUT, H, W)
    assert jnp.allclose(out, ref, atol=1e-5, rtol=1e-5)

    print("KERNEL_OK")
</pallas_src>

<mosaic_0001>
module attributes {stable_mosaic.version = 11 : i64} {
  func.func @pool_conv_bn_relu_kernel(%arg0: i32, %arg1: i32, %arg2: memref<1x4x256xf32, #tpu.memory_space<vmem>>, %arg3: memref<8x4xf32, #tpu.memory_space<vmem>>, %arg4: memref<8x1xf32, #tpu.memory_space<vmem>>, %arg5: memref<1x8x1xf32, #tpu.memory_space<vmem>>, %arg6: memref<4x256xf32, #tpu.memory_space<vmem>>) attributes {dimension_semantics = [#tpu.dimension_semantics<parallel>, #tpu.dimension_semantics<arbitrary>], iteration_bounds = array<i64: 2, 1>, scalar_prefetch = 0 : i64, scratch_operands = 1 : i64, tpu.core_type = #tpu.core_type<tc>, window_params = [{transform_indices = @transform_0, window_bounds = array<i64: 1, 4, 256>}, {pipeline_mode = #tpu.pipeline_mode<synchronous>, transform_indices = @transform_1, window_bounds = array<i64: 8, 4>}, {pipeline_mode = #tpu.pipeline_mode<synchronous>, transform_indices = @transform_2, window_bounds = array<i64: 8, 1>}, {transform_indices = @transform_3, window_bounds = array<i64: 1, 8, 1>}]} {
    %c0_i32 = arith.constant 0 : i32
    %0 = arith.cmpi eq, %arg1, %c0_i32 : i32
    %1 = arith.extui %0 : i1 to i32
    %c0_i32_0 = arith.constant 0 : i32
    %2 = arith.cmpi ne, %1, %c0_i32_0 : i32
    scf.if %2 {
      %cst = arith.constant 0.000000e+00 : f32
      %14 = vector.broadcast %cst : f32 to vector<4x256xf32>
      %c0_9 = arith.constant 0 : index
      %c0_10 = arith.constant 0 : index
      %15 = vector.load %arg6[%c0_9, %c0_10] : memref<4x256xf32, #tpu.memory_space<vmem>>, vector<4x256xf32>
      tpu.vector_store %arg6[%c0_9, %c0_10], %14 {strides = array<i32>} : memref<4x256xf32, #tpu.memory_space<vmem>>, vector<4x256xf32>,
    } else {
    }
    %c0_i32_1 = arith.constant 0 : i32
    %c256_i32 = arith.constant 256 : i32
    %3 = arith.muli %c0_i32_1, %c256_i32 : i32
    %4 = tpu.assume_multiple %3, 256 : i32
    %c0 = arith.constant 0 : index
    %c0_2 = arith.constant 0 : index
    %5 = vector.load %arg6[%c0, %c0_2] : memref<4x256xf32, #tpu.memory_space<vmem>>, vector<4x256xf32>
    %c0_3 = arith.constant 0 : index
    %c0_4 = arith.constant 0 : index
    %6 = arith.index_cast %4 : i32 to index
    %7 = vector.load %arg2[%c0_3, %c0_4, %6] : memref<1x4x256xf32, #tpu.memory_space<vmem>>, vector<1x4x256xf32>
    %8 = vector.shape_cast %7 : vector<1x4x256xf32> to vector<4x256xf32>
    %9 = arith.addf %5, %8 : vector<4x256xf32>
    %c0_5 = arith.constant 0 : index
    %c0_6 = arith.constant 0 : index
    %10 = vector.load %arg6[%c0_5, %c0_6] : memref<4x256xf32, #tpu.memory_space<vmem>>, vector<4x256xf32>
    tpu.vector_store %arg6[%c0_5, %c0_6], %9 {strides = array<i32>} : memref<4x256xf32, #tpu.memory_space<vmem>>, vector<4x256xf32>,
    %c1_i32 = arith.constant 1 : i32
    %c0_i32_7 = arith.constant 0 : i32
    %11 = arith.cmpi eq, %arg1, %c0_i32_7 : i32
    %12 = arith.extui %11 : i1 to i32
    %c0_i32_8 = arith.constant 0 : i32
    %13 = arith.cmpi ne, %12, %c0_i32_8 : i32
    scf.if %13 {
      %c0_9 = arith.constant 0 : index
      %c0_10 = arith.constant 0 : index
      %14 = vector.load %arg3[%c0_9, %c0_10] : memref<8x4xf32, #tpu.memory_space<vmem>>, vector<8x4xf32>
      %c0_11 = arith.constant 0 : index
      %c0_12 = arith.constant 0 : index
      %15 = vector.load %arg6[%c0_11, %c0_12] : memref<4x256xf32, #tpu.memory_space<vmem>>, vector<4x256xf32>
      %cst = arith.constant dense<0.000000e+00> : vector<8x256xf32>
      %16 = tpu.matmul %14, %15, %cst {dimension_numbers = #tpu.dot_dimension_numbers<[1], [0], [0], [1], [0, 0, 1, 1], [], []>} : vector<8x4xf32>, vector<4x256xf32>, vector<8x256xf32> -> vector<8x256xf32>
      %cst_13 = arith.constant dense<0.000000e+00> : vector<8xf32>
      %17 = vector.multi_reduction <add>, %16, %cst_13 [1] : vector<8x256xf32> to vector<8xf32>
      %18 = vector.shape_cast %17 : vector<8xf32> to vector<8x1xf32>
      %c0_14 = arith.constant 0 : index
      %c0_15 = arith.constant 0 : index
      %19 = vector.load %arg4[%c0_14, %c0_15] : memref<8x1xf32, #tpu.memory_space<vmem>>, vector<8x1xf32>
      %20 = arith.addf %18, %19 : vector<8x1xf32>
      %cst_16 = arith.constant 0.000000e+00 : f32
      %21 = vector.broadcast %cst_16 : f32 to vector<8x1xf32>
      %22 = arith.maximumf %20, %21 : vector<8x1xf32>
      %c0_17 = arith.constant 0 : index
      %c0_18 = arith.constant 0 : index
      %c0_19 = arith.constant 0 : index
      %23 = vector.load %arg5[%c0_17, %c0_18, %c0_19] : memref<1x8x1xf32, #tpu.memory_space<vmem>>, vector<1x8x1xf32>
      %24 = vector.shape_cast %23 : vector<1x8x1xf32> to vector<8x1xf32>
      %25 = vector.shape_cast %22 : vector<8x1xf32> to vector<1x8x1xf32>
      tpu.vector_store %arg5[%c0_17, %c0_18, %c0_19], %25 {strides = array<i32>} : memref<1x8x1xf32, #tpu.memory_space<vmem>>, vector<1x8x1xf32>,
    } else {
    }
    return
  }
  func.func @transform_0(%arg0: i32, %arg1: i32) -> (i32, i32, i32) {
    %c0_i32 = arith.constant 0 : i32
    %c0_i32_0 = arith.constant 0 : i32
    return %arg0, %c0_i32, %arg1 : i32, i32, i32
  }
  func.func @transform_1(%arg0: i32, %arg1: i32) -> (i32, i32) {
    %c0_i32 = arith.constant 0 : i32
    %c0_i32_0 = arith.constant 0 : i32
    %c0_i32_1 = arith.constant 0 : i32
    return %c0_i32, %c0_i32_0 : i32, i32
  }
  func.func @transform_2(%arg0: i32, %arg1: i32) -> (i32, i32) {
    %c0_i32 = arith.constant 0 : i32
    %c0_i32_0 = arith.constant 0 : i32
    %c0_i32_1 = arith.constant 0 : i32
    return %c0_i32, %c0_i32_0 : i32, i32
  }
  func.func @transform_3(%arg0: i32, %arg1: i32) -> (i32, i32, i32) {
    %c0_i32 = arith.constant 0 : i32
    %c0_i32_0 = arith.constant 0 : i32
    %c0_i32_1 = arith.constant 0 : i32
    return %arg0, %c0_i32, %c0_i32_0 : i32, i32, i32
  }
}

</mosaic_0001>

<llo_original>
// kernel: tpu_custom_call.1
$region0: #{tpu_custom_call.1}
  #allocation0 [shape = 'u32[]', space=smem, size = 0x4, offset = 0x4, fixed_abs, tag = 'smem constant byte address 0x4 - core index']
  #allocation1 [shape = 'u32[144,128]{1,0:T(1,128)}', space=vmem, size = 0x12000, scoped, tag = 'internal scratch']
  #allocation2 [shape = 'f32[4,256]{1,0:T(4,128)}', space=vmem, size = 0x1000, scoped, tag = 'scratch operand']
  %s0 = inlined_call_operand.vmem [shape: f32[2,4,256], index: 0, kind: input, shape index: {}]
  %s1 = inlined_call_operand.vmem [shape: f32[8,4], index: 1, kind: input, shape index: {}]
  %s2 = inlined_call_operand.vmem [shape: f32[8,1], index: 2, kind: input, shape index: {}]
  %s3 = inlined_call_operand.vmem [shape: f32[2,8,1], index: 3, kind: output, shape index: {}]
  %s4 = sld [smem:[#allocation0]]
  $region53: #{tpu_custom_call.1} parent=0
    _
  %s6 = ssub.s32 1, %s4
  %s7 = scalar_select 0, %s6, %s4
  loop: start=0, step=1, limit=4
  $region2: #{tpu_custom_call.1} parent=0 // loop_pre_header
    _
  $region3: #{tpu_custom_call.1} parent=0 // loop_header
    %s9 = sphi 0, %s13
    %p10 = scmp.ge.s32.totalorder %s9, 4
    %s16 = sphi 0, %s28
    %s17 = sphi 0, %s24
    %s18 = sphi 0, %s16
    %s19 = sphi 0, %s17
    %s20 = sphi 0, %s18
    %s21 = sphi 0, %s19
    %s33 = sphi 0, %s35
    %s36 = sphi 0, %s33
    %s37 = sphi 0, %s36
    %s53 = sphi 0, %s37
    %s57 = sphi 0, %s57
    %s59 = sphi 0, %s57
    %s60 = sphi 0, %s59
    %s74 = sphi 0, %s60
    %s78 = sphi 0, %s78
    %s80 = sphi 0, %s78
    %s81 = sphi 0, %s80
    %s95 = sphi 0, %s81
    %s101 = sphi 0, %s103
    %s104 = sphi 0, %s101
    %s105 = sphi 0, %s104
    %s121 = sphi 0, %s105
  $region4: #{tpu_custom_call.1} parent=0 // loop_header_branch
    %12 = sbr.rel (%p10) target = $region8
  $region5: #{tpu_custom_call.1} parent=0 // loop_body
    %s14 = ssub.s32 %s9, 1
    %s15 = ssub.s32 %s9, 2
    %s22 = sadd.s32 1, %s17
    %p23 = scmp.ge.s32.totalorder %s22, 1
    %s24 = scalar_select %p23, 0, %s22
    %s25 = sadd.s32 1, %s16
    %s26 = scalar_select %p23, %s25, %s16
    %p27 = scmp.ge.s32.totalorder %s26, 2
    %s28 = scalar_select %p27, 0, %s26
    %s29 = ssub.s32 %s16, %s28
    %s30 = ssub.s32 %s17, %s24
    %s31 = sor.u32 %s29, %s30
    %p32 = scmp.eq.s32.totalorder %s31, 0
    %s34 = sadd.s32 %s33, 1
    %s35 = scalar_select %p32, %s33, %s34
    %p38 = pneg %p32
    %p39 = scmp.eq.s32.totalorder %s9, 1
    %p40 = por %p38, %p39
    %p41 = scmp.ne.s32.totalorder %s33, %s36
    %p42 = scmp.eq.s32.totalorder %s9, 0
    %p43 = por %p41, %p42
    %p44 = scmp.ne.s32.totalorder %s33, %s36
    %p45 = scmp.eq.s32.totalorder %s14, 1
    %p46 = por %p44, %p45
    %p47 = scmp.ne.s32.totalorder %s36, %s37
    %p48 = scmp.eq.s32.totalorder %s14, 0
    %p49 = por %p47, %p48
    %p50 = scmp.ne.s32.totalorder %s36, %s37
    %p51 = scmp.eq.s32.totalorder %s15, 1
    %p52 = por %p50, %p51
    %p54 = scmp.ne.s32.totalorder %s37, %s53
    %p55 = scmp.eq.s32.totalorder %s15, 0
    %p56 = por %p54, %p55
    %s58 = sadd.s32 %s57, 1
    %p61 = scmp.eq.s32.totalorder %s9, 1
    %p62 = scmp.ne.s32.totalorder %s57, %s59
    %p63 = scmp.eq.s32.totalorder %s9, 0
    %p64 = por %p62, %p63
    %p65 = scmp.ne.s32.totalorder %s57, %s59
    %p66 = scmp.eq.s32.totalorder %s14, 1
    %p67 = por %p65, %p66
    %p68 = scmp.ne.s32.totalorder %s59, %s60
    %p69 = scmp.eq.s32.totalorder %s14, 0
    %p70 = por %p68, %p69
    %p71 = scmp.ne.s32.totalorder %s59, %s60
    %p72 = scmp.eq.s32.totalorder %s15, 1
    %p73 = por %p71, %p72
    %p75 = scmp.ne.s32.totalorder %s60, %s74
    %p76 = scmp.eq.s32.totalorder %s15, 0
    %p77 = por %p75, %p76
    %s79 = sadd.s32 %s78, 1
    %p82 = scmp.eq.s32.totalorder %s9, 1
    %p83 = scmp.ne.s32.totalorder %s78, %s80
    %p84 = scmp.eq.s32.totalorder %s9, 0
    %p85 = por %p83, %p84
    %p86 = scmp.ne.s32.totalorder %s78, %s80
    %p87 = scmp.eq.s32.totalorder %s14, 1
    %p88 = por %p86, %p87
    %p89 = scmp.ne.s32.totalorder %s80, %s81
    %p90 = scmp.eq.s32.totalorder %s14, 0
    %p91 = por %p89, %p90
    %p92 = scmp.ne.s32.totalorder %s80, %s81
    %p93 = scmp.eq.s32.totalorder %s15, 1
    %p94 = por %p92, %p93
    %p96 = scmp.ne.s32.totalorder %s81, %s95
    %p97 = scmp.eq.s32.totalorder %s15, 0
    %p98 = por %p96, %p97
    %s99 = ssub.s32 %s16, %s28
    %p100 = scmp.eq.s32.totalorder %s99, 0
    %s102 = sadd.s32 %s101, 1
    %s103 = scalar_select %p100, %s101, %s102
    %p106 = pneg %p100
    %p107 = scmp.eq.s32.totalorder %s9, 1
    %p108 = por %p106, %p107
    %p109 = scmp.ne.s32.totalorder %s101, %s104
    %p110 = scmp.eq.s32.totalorder %s9, 0
    %p111 = por %p109, %p110
    %p112 = scmp.ne.s32.totalorder %s101, %s104
    %p113 = scmp.eq.s32.totalorder %s14, 1
    %p114 = por %p112, %p113
    %p115 = scmp.ne.s32.totalorder %s104, %s105
    %p116 = scmp.eq.s32.totalorder %s14, 0
    %p117 = por %p115, %p116
    %p118 = scmp.ne.s32.totalorder %s104, %s105
    %p119 = scmp.eq.s32.totalorder %s15, 1
    %p120 = por %p118, %p119
    %p122 = scmp.ne.s32.totalorder %s105, %s121
    %p123 = scmp.eq.s32.totalorder %s15, 0
    %p124 = por %p122, %p123
    %p125 = scmp.le.s32.totalorder 1, %s9
    %p126 = scmp.lt.s32.totalorder %s9, 3
    %p127 = pnand %p125, %p126
    %p128 = pneg %p127
    // Predicated region
    $region9: #{tpu_custom_call.1} parent=5 // pred_check
      _
    $region10: #{tpu_custom_call.1} parent=5 // pred_check_branch
      %130 = sbr.rel (%p127) target = $region12
    $region11: #{tpu_custom_call.1} parent=5 // pred_region
      %s131 = ssub.s32 %s9, 1
      // Predicated region
      $region13: #{tpu_custom_call.1} parent=11 // pred_check
        %p132 = pneg %p70
      $region14: #{tpu_custom_call.1} parent=11 // pred_check_branch
        %134 = sbr.rel (%p132) target = $region16
      $region15: #{tpu_custom_call.1} parent=11 // pred_region
        _
      $region16: #{tpu_custom_call.1} parent=11 // pred_fallthru
        _
      // Predicated region
      $region17: #{tpu_custom_call.1} parent=11 // pred_check
        %p135 = pneg %p91
      $region18: #{tpu_custom_call.1} parent=11 // pred_check_branch
        %137 = sbr.rel (%p135) target = $region20
      $region19: #{tpu_custom_call.1} parent=11 // pred_region
        _
      $region20: #{tpu_custom_call.1} parent=11 // pred_fallthru
        _
    $region12: #{tpu_custom_call.1} parent=5 // pred_fallthru
      _
    %p138 = scmp.lt.s32.totalorder %s9, 2
    // Predicated region
    $region21: #{tpu_custom_call.1} parent=5 // pred_check
      %p139 = pneg %p138
    $region22: #{tpu_custom_call.1} parent=5 // pred_check_branch
      %141 = sbr.rel (%p139) target = $region24
    $region23: #{tpu_custom_call.1} parent=5 // pred_region
      // Predicated region
      $region25: #{tpu_custom_call.1} parent=23 // pred_check
        %p142 = pneg %p43
      $region26: #{tpu_custom_call.1} parent=23 // pred_check_branch
        %144 = sbr.rel (%p142) target = $region28
      $region27: #{tpu_custom_call.1} parent=23 // pred_region
        %s145 = smul.u32 2, %s17
        %p146 = scmp.lt.s32.totalorder %s16, 1
        %s147 = scalar_select %p146, %s16, 1
        %p148 = scmp.lt.s32.totalorder %s145, 1
        %s149 = scalar_select %p148, %s145, 1
        %s150 = smul.addr %s147, 2
        %s151 = sadd.s32 %s149, %s150
        %s152 = smul.addr %s151, 4
        %s153 = scalar_lea.vmem %s0, %s152
        %s154 = smul.u32 2, %s17
      $region28: #{tpu_custom_call.1} parent=23 // pred_fallthru
        _
    $region24: #{tpu_custom_call.1} parent=5 // pred_fallthru
      _
    %p155 = scmp.le.s32.totalorder 1, %s9
    %p156 = scmp.lt.s32.totalorder %s9, 3
    %p157 = pnand %p155, %p156
    %p158 = pneg %p157
    // Predicated region
    $region29: #{tpu_custom_call.1} parent=5 // pred_check
      _
    $region30: #{tpu_custom_call.1} parent=5 // pred_check_branch
      %160 = sbr.rel (%p157) target = $region32
    $region31: #{tpu_custom_call.1} parent=5 // pred_region
      %s161 = ssub.s32 %s9, 1
      %s162 = smul.u32 2, %s19
      %p163 = scmp.lt.s32.totalorder %s18, 1
      %s164 = scalar_select %p163, %s18, 1
      %p165 = scmp.lt.s32.totalorder %s162, 1
      %s166 = scalar_select %p165, %s162, 1
      %s167 = smul.addr %s164, 2
      %s168 = sadd.s32 %s166, %s167
      %s169 = smul.addr %s168, 4
      %s170 = scalar_lea.vmem %s0, %s169
      %p171 = pneg %p49
      %p172 = pneg %p46
      %p173 = pneg %p70
      %p174 = pneg %p67
      %p175 = pneg %p91
      %p176 = pneg %p88
      %p177 = pneg %p117
      %p178 = pneg %p114
      %p179 = scmp.lt.s32.totalorder %s18, 1
      %s180 = scalar_select %p179, %s18, 1
      %s181 = smul.addr %s180, 8
      %s182 = scalar_lea.vmem %s3, %s181
      %s183 = smul.u32 2, %s19
      %p184 = scmp.lt.s32.totalorder %s18, 1
      %s185 = scalar_select %p184, %s18, 1
      %p186 = scmp.lt.s32.totalorder %s183, 1
      %s187 = scalar_select %p186, %s183, 1
      %s188 = smul.addr %s185, 2
      %s189 = sadd.s32 %s187, %s188
      %s190 = smul.addr %s189, 4
      %s191 = scalar_lea.vmem %s0, %s190
      %s192 = smul.u32 2, %s19
      %p193 = scmp.lt.s32.totalorder %s18, 1
      %s194 = scalar_select %p193, %s18, 1
      %s195 = smul.addr %s194, 8
      %s196 = scalar_lea.vmem %s3, %s195
      %p197 = scmp.eq.s32.totalorder %s19, 0
      // Predicated region
      $region33: #{tpu_custom_call.1} parent=31 // pred_check
        %p198 = pneg %p197
      $region34: #{tpu_custom_call.1} parent=31 // pred_check_branch
        %200 = sbr.rel (%p198) target = $region36
      $region35: #{tpu_custom_call.1} parent=31 // pred_region
        %201 = vst [vmem:[#allocation2] sm:$0xff] 0.0
      $region36: #{tpu_custom_call.1} parent=31 // pred_fallthru
        _
      %v202 = vld [vmem:[#allocation2] sm:$0xff]
      %v203 = vld [vmem:[%s191] sm:$0xff]
      %v204 = vadd.f32 %v202, %v203
      %205 = vst [vmem:[#allocation2] sm:$0xff] %v204
      // Predicated region
      $region37: #{tpu_custom_call.1} parent=31 // pred_check
        %p206 = pneg %p197
      $region38: #{tpu_custom_call.1} parent=31 // pred_check_branch
        %208 = sbr.rel (%p206) target = $region40
      $region39: #{tpu_custom_call.1} parent=31 // pred_region
        %v209 = vld [vmem:[%s1] sm:$0xff]
        %v210 = vld [vmem:[#allocation2] sm:$0xff]
        %v212 = vcombine.high %v210, %v210
        %vm213 = vcmask 31744
        %v215 = vsel %vm213, %v209, 0
        %vm217 = vcmask 1043456
        %v218 = vsel %vm217, %v210, 0
        %v220 = vsel %vm217, %v212, 0
        %222 = vmatprep.subr.mxu0 0.0
        %223 = vmatpush1.msra.mxu0 0.0
        %224 = vmatprep.subr.mxu0 0.0
        %225 = vmatpush1.msra.mxu0 0.0
        %226 = vmatprep.subr.mxu0 0.0
        %227 = vmatpush1.msra.mxu0 0.0
        %228 = vmatprep.subr.mxu0 0.0
        %229 = vmatpush1.msra.mxu0 0.0
        %230 = vmatprep.subr.mxu0 0.0
        %231 = vmatpush1.msra.mxu0 0.0
        %232 = vmatprep.subr.mxu0 0.0
        %233 = vmatpush1.msra.mxu0 0.0
        %234 = vmatprep.subr.mxu0 0.0
        %235 = vmatpush1.msra.mxu0 0.0
        %236 = vmatprep.subr.mxu0 0.0
        %237 = vmatpush1.msra.mxu0 0.0
        %238 = vmatprep.subr.mxu0 0.0
        %239 = vmatpush1.msra.mxu0 0.0
        %240 = vmatprep.subr.mxu0 0.0
        %241 = vmatpush1.msra.mxu0 0.0
        %242 = vmatprep.subr.mxu0 0.0
        %243 = vmatpush1.msra.mxu0 0.0
        %244 = vmatprep.subr.mxu0 0.0
        %245 = vmatpush1.msra.mxu0 0.0
        %246 = vmatprep.subr.mxu0 0.0
        %247 = vmatpush1.msra.mxu0 0.0
        %248 = vmatprep.subr.mxu0 0.0
        %249 = vmatpush1.msra.mxu0 0.0
        %250 = vmatprep.subr.mxu0 0.0
        %251 = vmatpush1.msra.mxu0 0.0
        %252 = vmatprep.subr.mxu0 %v220
        %253 = vmatpush1.msra.mxu0 %v218
        %254 = vmatprep.subr.mxu0 0.0
        %255 = vmatpush2.msra.mxu0 0.0
        %256 = vmatprep.subr.mxu0 0.0
        %257 = vmatpush2.msra.mxu0 0.0
        %258 = vmatprep.subr.mxu0 0.0
        %259 = vmatpush2.msra.mxu0 0.0
        %260 = vmatprep.subr.mxu0 0.0
        %261 = vmatpush2.msra.mxu0 0.0
        %262 = vmatprep.subr.mxu0 0.0
        %263 = vmatpush2.msra.mxu0 0.0
        %264 = vmatprep.subr.mxu0 0.0
        %265 = vmatpush2.msra.mxu0 0.0
        %266 = vmatprep.subr.mxu0 0.0
        %267 = vmatpush2.msra.mxu0 0.0
        %268 = vmatprep.subr.mxu0 0.0
        %269 = vmatpush2.msra.mxu0 0.0
        %270 = vmatprep.subr.mxu0 0.0
        %271 = vmatpush2.msra.mxu0 0.0
        %272 = vmatprep.subr.mxu0 0.0
        %273 = vmatpush2.msra.mxu0 0.0
        %274 = vmatprep.subr.mxu0 0.0
        %275 = vmatpush2.msra.mxu0 0.0
        %276 = vmatprep.subr.mxu0 0.0
        %277 = vmatpush2.msra.mxu0 0.0
        %278 = vmatprep.subr.mxu0 0.0
        %279 = vmatpush2.msra.mxu0 0.0
        %280 = vmatprep.subr.mxu0 0.0
        %281 = vmatpush2.msra.mxu0 0.0
        %282 = vmatprep.subr.mxu0 0.0
        %283 = vmatpush2.msra.mxu0 0.0
        %284 = vmatprep.subr.mxu0 0.0
        %285 = vmatpush2.msra.mxu0 0.0
        %286 = vmatprep.mubr.f32.mxu0 0.0
        %287 = vmatmul.mubr.f32.gmra.mxu0 %v215
        %v288 = vpop.f32.mrf.mxu0
        %v289 = vadd.f32 0.0, %v288
        %v290 = vpop.f32.mrf.mxu0
        %v291 = vadd.f32 0.0, %v290
        %292 = vdwg.mxu0
        %v293 = vadd.f32 %v289, %v291
        %294 = vadd.xlane.f32.xlu0 %v293
        %v295 = vpop.xlane.xlu0 %294
        %v296 = vld [vmem:[%s2] sm:$0xff]
        %v297 = vadd.f32 %v295, %v296
        %v298 = vmax.f32 %v297, 0.0
        %vm299 = vcmask 7168
        %300 = vst.msk [vmem:[%s196] sm:$0xff] %vm299, %v298
      $region40: #{tpu_custom_call.1} parent=31 // pred_fallthru
        _
      %p301 = scmp.lt.s32.totalorder %s18, 1
      %s302 = scalar_select %p301, %s18, 1
      %s303 = smul.addr %s302, 8
      %s304 = scalar_lea.vmem %s3, %s303
      // Predicated region
      $region41: #{tpu_custom_call.1} parent=31 // pred_check
        %p305 = pneg %p114
      $region42: #{tpu_custom_call.1} parent=31 // pred_check_branch
        %307 = sbr.rel (%p305) target = $region44
      $region43: #{tpu_custom_call.1} parent=31 // pred_region
        _
      $region44: #{tpu_custom_call.1} parent=31 // pred_fallthru
        _
    $region32: #{tpu_custom_call.1} parent=5 // pred_fallthru
      _
    %p308 = scmp.le.s32.totalorder 2, %s9
    // Predicated region
    $region45: #{tpu_custom_call.1} parent=5 // pred_check
      %p309 = pneg %p308
    $region46: #{tpu_custom_call.1} parent=5 // pred_check_branch
      %311 = sbr.rel (%p309) target = $region48
    $region47: #{tpu_custom_call.1} parent=5 // pred_region
      %s312 = ssub.s32 %s9, 2
      // Predicated region
      $region49: #{tpu_custom_call.1} parent=47 // pred_check
        %p313 = pneg %p120
      $region50: #{tpu_custom_call.1} parent=47 // pred_check_branch
        %315 = sbr.rel (%p313) target = $region52
      $region51: #{tpu_custom_call.1} parent=47 // pred_region
        %p316 = scmp.lt.s32.totalorder %s20, 1
        %s317 = scalar_select %p316, %s20, 1
        %s318 = smul.addr %s317, 8
        %s319 = scalar_lea.vmem %s3, %s318
      $region52: #{tpu_custom_call.1} parent=47 // pred_fallthru
        _
    $region48: #{tpu_custom_call.1} parent=5 // pred_fallthru
      _
  $region6: #{tpu_custom_call.1} parent=0 // loop_footer
    %s13 = sadd.s32 1, %s9
  $region7: #{tpu_custom_call.1} parent=0 // loop_footer_branch
    %8 = sbr.rel target = $region3
  $region8: #{tpu_custom_call.1} parent=0 // loop_exit
    _

</llo_original>
